<compile_context>
chip_gen: v6e
topology: v6e:2x2x1
jax: 0.10.0
libtpu: 0.0.40
codegen_flags: <defaults>
</compile_context>

<pallas_src>
import jax
import jax.numpy as jnp
from jax import lax
from jax.experimental import pallas as pl
from jax.experimental.pallas import tpu as pltpu


def _round_up(x, m):
    return (x + m - 1) // m * m


def _make_kernel(C_in, C_out, H, W, K, p, b_tile, halo, dot_dtype):
    HW = H * W

    def kernel(x_ref, m_ref, w_ref, cmask_ref, o_ref, pad_ref):
        # x_ref:     (b_tile, C_in, HW)   activations (compute dtype, f32)
        # m_ref:     (b_tile, 1, HW)      pad mask (nonzero = padded -> zero)
        # w_ref:     (K*K, C_out, C_in)   conv weight, one tap per leading idx
        # cmask_ref: (K, HW)              column-validity mask per dj
        # o_ref:     (b_tile, C_out, HW)
        # pad_ref:   (C_in, HW + 2*halo)  zero-halo flat VMEM scratch

        # Zero only the halos; the HW-wide centre is fully overwritten below.
        # Done every step (two small aligned stores) instead of once under
        # `pl.when(program_id == 0)`: scratch is per-core and a megacore shard
        # of this "parallel" grid axis may never run step 0.
        zero_halo = jnp.zeros((C_in, halo), dtype=pad_ref.dtype)
        pad_ref[:, :halo] = zero_halo
        pad_ref[:, halo + HW:] = zero_halo

        for b in range(b_tile):
            # masked_fill(mask, 0): `where` (not multiply) for NaN/Inf parity.
            xm = jnp.where(m_ref[b] != 0, 0.0, x_ref[b])        # (C_in, HW)

            # Lane-aligned centre store (halo is a multiple of 128).
            pad_ref[:, halo:halo + HW] = xm

            # Tap-accumulated matmuls, f32 accumulation.  Out-of-range rows
            # land in the zero halo; out-of-range columns are killed by the
            # (de-duplicated) per-dj validity mask.
            acc = jnp.zeros((C_out, HW), jnp.float32)
            for di in range(K):
                for dj in range(K):
                    t = di * K + dj
                    off = (di - p) * W + (dj - p)
                    win = pad_ref[:, halo + off:halo + off + HW]   # (C_in, HW)
                    if dj != p:  # centre column tap is always valid
                        win = win * cmask_ref[pl.ds(dj, 1), :]     # f32 x f32
                    acc = acc + jnp.dot(w_ref[t], win.astype(dot_dtype),
                                        preferred_element_type=jnp.float32)
            o_ref[b] = acc.astype(o_ref.dtype)

    return kernel


def mask_conv2d(x, mask, weight, padding, *, b_tile=1, dot_dtype=jnp.bfloat16):
    """Forward of MaskConv2d.

    x:      (B, C_in, H, W) float
    mask:   (B, 1, H, W) bool (True = padding position)
    weight: (C_out, C_in, K, K), conv has stride=1, bias=False
    """
    B, C_in, H, W = x.shape
    C_out, C_in2, K, K2 = weight.shape
    assert C_in2 == C_in and K == K2
    assert mask.shape == (B, 1, H, W)
    p = int(padding)
    # TODO(synk): only the "same"-size case (2*padding == K-1), which is the
    # CNN_Nested_NER configuration, is implemented; other stride-1 paddings
    # change the output spatial size and the flat-offset math.
    assert 2 * p == K - 1, "only the 'same' conv case (2*padding == K-1) is supported"
    assert B % b_tile == 0, "b_tile must divide the batch size"

    HW = H * W
    # Halo rounded up to 128 lanes so the centre copy is a lane-aligned store.
    halo = _round_up(p * W + p, 128)
    padw = HW + 2 * halo
    compute_dtype = x.dtype

    # Layout plumbing (wrapper side): flatten spatial onto the lane axis.
    x_flat = x.reshape(B, C_in, HW)
    m_flat = mask.reshape(B, 1, HW).astype(compute_dtype)

    # Weight re-ordered so each tap's (C_out, C_in) slab is a tile-aligned
    # load; cast to the MXU input dtype once here.
    w_taps = weight.transpose(2, 3, 0, 1).reshape(K * K, C_out, C_in)
    w_taps = w_taps.astype(dot_dtype)

    # K de-duplicated column-validity masks (one per dj), built on the host and
    # DMA'd into VMEM once (constant block index).  Kept in f32 (v5e VPU).
    jj = jnp.arange(HW, dtype=jnp.int32) % W
    col_valid = jnp.stack(
        [((jj + (dj - p) >= 0) & (jj + (dj - p) < W)).astype(compute_dtype)
         for dj in range(K)], axis=0)                                # (K, HW)

    kernel = _make_kernel(C_in, C_out, H, W, K, p, b_tile, halo, dot_dtype)

    out_flat = pl.pallas_call(
        kernel,
        out_shape=jax.ShapeDtypeStruct((B, C_out, HW), compute_dtype),
        grid_spec=pltpu.PrefetchScalarGridSpec(
            num_scalar_prefetch=0,
            grid=(B // b_tile,),
            in_specs=[
                pl.BlockSpec((b_tile, C_in, HW), lambda g: (g, 0, 0)),
                pl.BlockSpec((b_tile, 1, HW), lambda g: (g, 0, 0)),
                # constant block indices -> fetched into VMEM only once
                pl.BlockSpec((K * K, C_out, C_in), lambda g: (0, 0, 0)),
                pl.BlockSpec((K, HW), lambda g: (0, 0)),
            ],
            out_specs=pl.BlockSpec((b_tile, C_out, HW), lambda g: (g, 0, 0)),
            scratch_shapes=[pltpu.VMEM((C_in, padw), compute_dtype)],
        ),
        compiler_params=pltpu.CompilerParams(
            dimension_semantics=("parallel",),
            # Toy shapes fit easily; for production NER sizes (HW = L^2 ~ 10k+)
            # raise this on v6e (128 MiB physical) and add an HW-tile grid axis
            # (with halo) to fit v7x's 64 MiB VMEM.
            vmem_limit_bytes=32 * 1024 * 1024,
        ),
    )(x_flat, m_flat, w_taps, col_valid)

    return out_flat.reshape(B, C_out, H, W)


def reference(x, mask, weight, padding, operand_dtype=jnp.float32):
    """f32 conv reference; optionally rounds the conv operands through
    `operand_dtype` to mirror the kernel's MXU input precision."""
    xm = jnp.where(mask, 0.0, x)
    xm = xm.astype(operand_dtype).astype(jnp.float32)
    w = weight.astype(operand_dtype).astype(jnp.float32)
    return lax.conv_general_dilated(
        xm, w, window_strides=(1, 1),
        padding=[(padding, padding), (padding, padding)],
        dimension_numbers=("NCHW", "OIHW", "NCHW"))


if __name__ == "__main__":
    B, C_in, H, W_sp = 2, 4, 16, 16
    C_out, K, pad = 8, 3, 1

    key = jax.random.PRNGKey(0)
    kx, kw = jax.random.split(key, 2)
    x = jax.random.normal(kx, (B, C_in, H, W_sp), dtype=jnp.float32)
    # Deterministic kaiming-style init for the conv weight (bias=False module).
    fan_in = C_in * K * K
    weight = (2.0 / fan_in) ** 0.5 * jax.random.normal(
        kw, (C_out, C_in, K, K), dtype=jnp.float32)

    # CNN_Nested_NER-style (bsz, 1, L, L) pad mask: True = padded position.
    lengths = jnp.array([16, 12])
    ii = jnp.arange(H)[None, :, None]
    jj = jnp.arange(W_sp)[None, None, :]
    mask = ((ii >= lengths[:, None, None]) | (jj >= lengths[:, None, None]))[:, None]

    # 1) bf16 MXU inputs (production setting), b_tile=1 -> 2 parallel grid steps.
    out_bf16 = jax.block_until_ready(
        mask_conv2d(x, mask, weight, pad, b_tile=1, dot_dtype=jnp.bfloat16))
    assert out_bf16.shape == (B, C_out, H, W_sp), out_bf16.shape
    ref_bf16 = reference(x, mask, weight, pad, operand_dtype=jnp.bfloat16)
    err_bf16 = jnp.max(jnp.abs(out_bf16 - ref_bf16))
    assert jnp.allclose(out_bf16, ref_bf16, atol=1e-3, rtol=1e-3), \
        f"bf16 path max abs err = {err_bf16}"

    # 2) f32 MXU inputs, whole batch in one grid step (b_tile=2): exact parity
    #    with the f32 reference, and exercises the batch-tiling path.
    out_f32 = jax.block_until_ready(
        mask_conv2d(x, mask, weight, pad, b_tile=2, dot_dtype=jnp.float32))
    ref_f32 = reference(x, mask, weight, pad)
    err_f32 = jnp.max(jnp.abs(out_f32 - ref_f32))
    assert jnp.allclose(out_f32, ref_f32, atol=1e-4, rtol=1e-4), \
        f"f32 path max abs err = {err_f32}"

    print("KERNEL_OK")
</pallas_src>

<mosaic_0001>
module attributes {stable_mosaic.version = 11 : i64} {
  func.func @kernel(%arg0: i32, %arg1: memref<1x4x256xf32, #tpu.memory_space<vmem>>, %arg2: memref<1x1x256xf32, #tpu.memory_space<vmem>>, %arg3: memref<9x8x4xbf16, #tpu.memory_space<vmem>>, %arg4: memref<3x256xf32, #tpu.memory_space<vmem>>, %arg5: memref<1x8x256xf32, #tpu.memory_space<vmem>>, %arg6: memref<4x512xf32, #tpu.memory_space<vmem>>) attributes {dimension_semantics = [#tpu.dimension_semantics<parallel>], iteration_bounds = array<i64: 2>, scalar_prefetch = 0 : i64, scratch_operands = 1 : i64, tpu.core_type = #tpu.core_type<tc>, window_params = [{transform_indices = @transform_0, window_bounds = array<i64: 1, 4, 256>}, {transform_indices = @transform_1, window_bounds = array<i64: 1, 1, 256>}, {pipeline_mode = #tpu.pipeline_mode<synchronous>, transform_indices = @transform_2, window_bounds = array<i64: 9, 8, 4>}, {pipeline_mode = #tpu.pipeline_mode<synchronous>, transform_indices = @transform_3, window_bounds = array<i64: 3, 256>}, {transform_indices = @transform_4, window_bounds = array<i64: 1, 8, 256>}]} {
    %cst = arith.constant 0.000000e+00 : f32
    %0 = vector.broadcast %cst : f32 to vector<4x128xf32>
    %c0 = arith.constant 0 : index
    %c0_0 = arith.constant 0 : index
    %1 = vector.load %arg6[%c0, %c0_0] : memref<4x512xf32, #tpu.memory_space<vmem>>, vector<4x128xf32>
    tpu.vector_store %arg6[%c0, %c0_0], %0 {strides = array<i32>} : memref<4x512xf32, #tpu.memory_space<vmem>>, vector<4x128xf32>,
    %c0_1 = arith.constant 0 : index
    %c384 = arith.constant 384 : index
    %2 = vector.load %arg6[%c0_1, %c384] : memref<4x512xf32, #tpu.memory_space<vmem>>, vector<4x128xf32>
    tpu.vector_store %arg6[%c0_1, %c384], %0 {strides = array<i32>} : memref<4x512xf32, #tpu.memory_space<vmem>>, vector<4x128xf32>,
    %c0_2 = arith.constant 0 : index
    %c0_3 = arith.constant 0 : index
    %c0_4 = arith.constant 0 : index
    %3 = vector.load %arg2[%c0_2, %c0_3, %c0_4] : memref<1x1x256xf32, #tpu.memory_space<vmem>>, vector<1x1x256xf32>
    %4 = vector.shape_cast %3 : vector<1x1x256xf32> to vector<1x256xf32>
    %cst_5 = arith.constant 0.000000e+00 : f32
    %5 = vector.broadcast %cst_5 : f32 to vector<1x256xf32>
    %6 = arith.cmpf one, %4, %5 : vector<1x256xf32>
    %c0_6 = arith.constant 0 : index
    %c0_7 = arith.constant 0 : index
    %c0_8 = arith.constant 0 : index
    %7 = vector.load %arg1[%c0_6, %c0_7, %c0_8] : memref<1x4x256xf32, #tpu.memory_space<vmem>>, vector<1x4x256xf32>
    %8 = vector.shape_cast %7 : vector<1x4x256xf32> to vector<4x256xf32>
    %cst_9 = arith.constant 0.000000e+00 : f32
    %9 = vector.shape_cast %6 : vector<1x256xi1> to vector<1x256xi1>
    %10 = vector.broadcast %9 : vector<1x256xi1> to vector<4x256xi1>
    %11 = vector.broadcast %cst_9 : f32 to vector<4x256xf32>
    %12 = arith.select %10, %11, %8 : vector<4x256xi1>, vector<4x256xf32>
    %c0_10 = arith.constant 0 : index
    %c128 = arith.constant 128 : index
    %13 = vector.load %arg6[%c0_10, %c128] : memref<4x512xf32, #tpu.memory_space<vmem>>, vector<4x256xf32>
    tpu.vector_store %arg6[%c0_10, %c128], %12 {strides = array<i32>} : memref<4x512xf32, #tpu.memory_space<vmem>>, vector<4x256xf32>,
    %cst_11 = arith.constant 0.000000e+00 : f32
    %14 = vector.broadcast %cst_11 : f32 to vector<8x256xf32>
    %c0_12 = arith.constant 0 : index
    %c111 = arith.constant 111 : index
    %15 = vector.load %arg6[%c0_12, %c111] : memref<4x512xf32, #tpu.memory_space<vmem>>, vector<4x256xf32>
    %c0_13 = arith.constant 0 : index
    %c0_14 = arith.constant 0 : index
    %16 = vector.load %arg4[%c0_13, %c0_14] : memref<3x256xf32, #tpu.memory_space<vmem>>, vector<1x256xf32>
    %17 = vector.broadcast %16 : vector<1x256xf32> to vector<4x256xf32>
    %18 = arith.mulf %15, %17 : vector<4x256xf32>
    %c0_15 = arith.constant 0 : index
    %c0_16 = arith.constant 0 : index
    %c0_17 = arith.constant 0 : index
    %19 = vector.load %arg3[%c0_15, %c0_16, %c0_17] : memref<9x8x4xbf16, #tpu.memory_space<vmem>>, vector<1x8x4xbf16>
    %20 = vector.shape_cast %19 : vector<1x8x4xbf16> to vector<8x4xbf16>
    %21 = arith.truncf %18 : vector<4x256xf32> to vector<4x256xbf16>
    %cst_18 = arith.constant dense<0.000000e+00> : vector<8x256xf32>
    %22 = tpu.matmul %20, %21, %cst_18 {dimension_numbers = #tpu.dot_dimension_numbers<[1], [0], [0], [1], [0, 0, 1, 1], [], []>} : vector<8x4xbf16>, vector<4x256xbf16>, vector<8x256xf32> -> vector<8x256xf32>
    %23 = arith.addf %14, %22 : vector<8x256xf32>
    %c0_19 = arith.constant 0 : index
    %c112 = arith.constant 112 : index
    %24 = vector.load %arg6[%c0_19, %c112] : memref<4x512xf32, #tpu.memory_space<vmem>>, vector<4x256xf32>
    %c1 = arith.constant 1 : index
    %c0_20 = arith.constant 0 : index
    %c0_21 = arith.constant 0 : index
    %25 = vector.load %arg3[%c1, %c0_20, %c0_21] : memref<9x8x4xbf16, #tpu.memory_space<vmem>>, vector<1x8x4xbf16>
    %26 = vector.shape_cast %25 : vector<1x8x4xbf16> to vector<8x4xbf16>
    %27 = arith.truncf %24 : vector<4x256xf32> to vector<4x256xbf16>
    %cst_22 = arith.constant dense<0.000000e+00> : vector<8x256xf32>
    %28 = tpu.matmul %26, %27, %cst_22 {dimension_numbers = #tpu.dot_dimension_numbers<[1], [0], [0], [1], [0, 0, 1, 1], [], []>} : vector<8x4xbf16>, vector<4x256xbf16>, vector<8x256xf32> -> vector<8x256xf32>
    %29 = arith.addf %23, %28 : vector<8x256xf32>
    %c0_23 = arith.constant 0 : index
    %c113 = arith.constant 113 : index
    %30 = vector.load %arg6[%c0_23, %c113] : memref<4x512xf32, #tpu.memory_space<vmem>>, vector<4x256xf32>
    %c2 = arith.constant 2 : index
    %c0_24 = arith.constant 0 : index
    %31 = vector.load %arg4[%c2, %c0_24] : memref<3x256xf32, #tpu.memory_space<vmem>>, vector<1x256xf32>
    %32 = vector.broadcast %31 : vector<1x256xf32> to vector<4x256xf32>
    %33 = arith.mulf %30, %32 : vector<4x256xf32>
    %c2_25 = arith.constant 2 : index
    %c0_26 = arith.constant 0 : index
    %c0_27 = arith.constant 0 : index
    %34 = vector.load %arg3[%c2_25, %c0_26, %c0_27] : memref<9x8x4xbf16, #tpu.memory_space<vmem>>, vector<1x8x4xbf16>
    %35 = vector.shape_cast %34 : vector<1x8x4xbf16> to vector<8x4xbf16>
    %36 = arith.truncf %33 : vector<4x256xf32> to vector<4x256xbf16>
    %cst_28 = arith.constant dense<0.000000e+00> : vector<8x256xf32>
    %37 = tpu.matmul %35, %36, %cst_28 {dimension_numbers = #tpu.dot_dimension_numbers<[1], [0], [0], [1], [0, 0, 1, 1], [], []>} : vector<8x4xbf16>, vector<4x256xbf16>, vector<8x256xf32> -> vector<8x256xf32>
    %38 = arith.addf %29, %37 : vector<8x256xf32>
    %c0_29 = arith.constant 0 : index
    %c127 = arith.constant 127 : index
    %39 = vector.load %arg6[%c0_29, %c127] : memref<4x512xf32, #tpu.memory_space<vmem>>, vector<4x256xf32>
    %c0_30 = arith.constant 0 : index
    %c0_31 = arith.constant 0 : index
    %40 = vector.load %arg4[%c0_30, %c0_31] : memref<3x256xf32, #tpu.memory_space<vmem>>, vector<1x256xf32>
    %41 = vector.broadcast %40 : vector<1x256xf32> to vector<4x256xf32>
    %42 = arith.mulf %39, %41 : vector<4x256xf32>
    %c3 = arith.constant 3 : index
    %c0_32 = arith.constant 0 : index
    %c0_33 = arith.constant 0 : index
    %43 = vector.load %arg3[%c3, %c0_32, %c0_33] : memref<9x8x4xbf16, #tpu.memory_space<vmem>>, vector<1x8x4xbf16>
    %44 = vector.shape_cast %43 : vector<1x8x4xbf16> to vector<8x4xbf16>
    %45 = arith.truncf %42 : vector<4x256xf32> to vector<4x256xbf16>
    %cst_34 = arith.constant dense<0.000000e+00> : vector<8x256xf32>
    %46 = tpu.matmul %44, %45, %cst_34 {dimension_numbers = #tpu.dot_dimension_numbers<[1], [0], [0], [1], [0, 0, 1, 1], [], []>} : vector<8x4xbf16>, vector<4x256xbf16>, vector<8x256xf32> -> vector<8x256xf32>
    %47 = arith.addf %38, %46 : vector<8x256xf32>
    %c0_35 = arith.constant 0 : index
    %c128_36 = arith.constant 128 : index
    %48 = vector.load %arg6[%c0_35, %c128_36] : memref<4x512xf32, #tpu.memory_space<vmem>>, vector<4x256xf32>
    %c4 = arith.constant 4 : index
    %c0_37 = arith.constant 0 : index
    %c0_38 = arith.constant 0 : index
    %49 = vector.load %arg3[%c4, %c0_37, %c0_38] : memref<9x8x4xbf16, #tpu.memory_space<vmem>>, vector<1x8x4xbf16>
    %50 = vector.shape_cast %49 : vector<1x8x4xbf16> to vector<8x4xbf16>
    %51 = arith.truncf %48 : vector<4x256xf32> to vector<4x256xbf16>
    %cst_39 = arith.constant dense<0.000000e+00> : vector<8x256xf32>
    %52 = tpu.matmul %50, %51, %cst_39 {dimension_numbers = #tpu.dot_dimension_numbers<[1], [0], [0], [1], [0, 0, 1, 1], [], []>} : vector<8x4xbf16>, vector<4x256xbf16>, vector<8x256xf32> -> vector<8x256xf32>
    %53 = arith.addf %47, %52 : vector<8x256xf32>
    %c0_40 = arith.constant 0 : index
    %c129 = arith.constant 129 : index
    %54 = vector.load %arg6[%c0_40, %c129] : memref<4x512xf32, #tpu.memory_space<vmem>>, vector<4x256xf32>
    %c2_41 = arith.constant 2 : index
    %c0_42 = arith.constant 0 : index
    %55 = vector.load %arg4[%c2_41, %c0_42] : memref<3x256xf32, #tpu.memory_space<vmem>>, vector<1x256xf32>
    %56 = vector.broadcast %55 : vector<1x256xf32> to vector<4x256xf32>
    %57 = arith.mulf %54, %56 : vector<4x256xf32>
    %c5 = arith.constant 5 : index
    %c0_43 = arith.constant 0 : index
    %c0_44 = arith.constant 0 : index
    %58 = vector.load %arg3[%c5, %c0_43, %c0_44] : memref<9x8x4xbf16, #tpu.memory_space<vmem>>, vector<1x8x4xbf16>
    %59 = vector.shape_cast %58 : vector<1x8x4xbf16> to vector<8x4xbf16>
    %60 = arith.truncf %57 : vector<4x256xf32> to vector<4x256xbf16>
    %cst_45 = arith.constant dense<0.000000e+00> : vector<8x256xf32>
    %61 = tpu.matmul %59, %60, %cst_45 {dimension_numbers = #tpu.dot_dimension_numbers<[1], [0], [0], [1], [0, 0, 1, 1], [], []>} : vector<8x4xbf16>, vector<4x256xbf16>, vector<8x256xf32> -> vector<8x256xf32>
    %62 = arith.addf %53, %61 : vector<8x256xf32>
    %c0_46 = arith.constant 0 : index
    %c143 = arith.constant 143 : index
    %63 = vector.load %arg6[%c0_46, %c143] : memref<4x512xf32, #tpu.memory_space<vmem>>, vector<4x256xf32>
    %c0_47 = arith.constant 0 : index
    %c0_48 = arith.constant 0 : index
    %64 = vector.load %arg4[%c0_47, %c0_48] : memref<3x256xf32, #tpu.memory_space<vmem>>, vector<1x256xf32>
    %65 = vector.broadcast %64 : vector<1x256xf32> to vector<4x256xf32>
    %66 = arith.mulf %63, %65 : vector<4x256xf32>
    %c6 = arith.constant 6 : index
    %c0_49 = arith.constant 0 : index
    %c0_50 = arith.constant 0 : index
    %67 = vector.load %arg3[%c6, %c0_49, %c0_50] : memref<9x8x4xbf16, #tpu.memory_space<vmem>>, vector<1x8x4xbf16>
    %68 = vector.shape_cast %67 : vector<1x8x4xbf16> to vector<8x4xbf16>
    %69 = arith.truncf %66 : vector<4x256xf32> to vector<4x256xbf16>
    %cst_51 = arith.constant dense<0.000000e+00> : vector<8x256xf32>
    %70 = tpu.matmul %68, %69, %cst_51 {dimension_numbers = #tpu.dot_dimension_numbers<[1], [0], [0], [1], [0, 0, 1, 1], [], []>} : vector<8x4xbf16>, vector<4x256xbf16>, vector<8x256xf32> -> vector<8x256xf32>
    %71 = arith.addf %62, %70 : vector<8x256xf32>
    %c0_52 = arith.constant 0 : index
    %c144 = arith.constant 144 : index
    %72 = vector.load %arg6[%c0_52, %c144] : memref<4x512xf32, #tpu.memory_space<vmem>>, vector<4x256xf32>
    %c7 = arith.constant 7 : index
    %c0_53 = arith.constant 0 : index
    %c0_54 = arith.constant 0 : index
    %73 = vector.load %arg3[%c7, %c0_53, %c0_54] : memref<9x8x4xbf16, #tpu.memory_space<vmem>>, vector<1x8x4xbf16>
    %74 = vector.shape_cast %73 : vector<1x8x4xbf16> to vector<8x4xbf16>
    %75 = arith.truncf %72 : vector<4x256xf32> to vector<4x256xbf16>
    %cst_55 = arith.constant dense<0.000000e+00> : vector<8x256xf32>
    %76 = tpu.matmul %74, %75, %cst_55 {dimension_numbers = #tpu.dot_dimension_numbers<[1], [0], [0], [1], [0, 0, 1, 1], [], []>} : vector<8x4xbf16>, vector<4x256xbf16>, vector<8x256xf32> -> vector<8x256xf32>
    %77 = arith.addf %71, %76 : vector<8x256xf32>
    %c0_56 = arith.constant 0 : index
    %c145 = arith.constant 145 : index
    %78 = vector.load %arg6[%c0_56, %c145] : memref<4x512xf32, #tpu.memory_space<vmem>>, vector<4x256xf32>
    %c2_57 = arith.constant 2 : index
    %c0_58 = arith.constant 0 : index
    %79 = vector.load %arg4[%c2_57, %c0_58] : memref<3x256xf32, #tpu.memory_space<vmem>>, vector<1x256xf32>
    %80 = vector.broadcast %79 : vector<1x256xf32> to vector<4x256xf32>
    %81 = arith.mulf %78, %80 : vector<4x256xf32>
    %c8 = arith.constant 8 : index
    %c0_59 = arith.constant 0 : index
    %c0_60 = arith.constant 0 : index
    %82 = vector.load %arg3[%c8, %c0_59, %c0_60] : memref<9x8x4xbf16, #tpu.memory_space<vmem>>, vector<1x8x4xbf16>
    %83 = vector.shape_cast %82 : vector<1x8x4xbf16> to vector<8x4xbf16>
    %84 = arith.truncf %81 : vector<4x256xf32> to vector<4x256xbf16>
    %cst_61 = arith.constant dense<0.000000e+00> : vector<8x256xf32>
    %85 = tpu.matmul %83, %84, %cst_61 {dimension_numbers = #tpu.dot_dimension_numbers<[1], [0], [0], [1], [0, 0, 1, 1], [], []>} : vector<8x4xbf16>, vector<4x256xbf16>, vector<8x256xf32> -> vector<8x256xf32>
    %86 = arith.addf %77, %85 : vector<8x256xf32>
    %c0_62 = arith.constant 0 : index
    %c0_63 = arith.constant 0 : index
    %c0_64 = arith.constant 0 : index
    %87 = vector.load %arg5[%c0_62, %c0_63, %c0_64] : memref<1x8x256xf32, #tpu.memory_space<vmem>>, vector<1x8x256xf32>
    %88 = vector.shape_cast %87 : vector<1x8x256xf32> to vector<8x256xf32>
    %89 = vector.shape_cast %86 : vector<8x256xf32> to vector<1x8x256xf32>
    tpu.vector_store %arg5[%c0_62, %c0_63, %c0_64], %89 {strides = array<i32>} : memref<1x8x256xf32, #tpu.memory_space<vmem>>, vector<1x8x256xf32>,
    return
  }
  func.func @transform_0(%arg0: i32) -> (i32, i32, i32) {
    %c0_i32 = arith.constant 0 : i32
    %c0_i32_0 = arith.constant 0 : i32
    %c0_i32_1 = arith.constant 0 : i32
    return %arg0, %c0_i32, %c0_i32_0 : i32, i32, i32
  }
  func.func @transform_1(%arg0: i32) -> (i32, i32, i32) {
    %c0_i32 = arith.constant 0 : i32
    %c0_i32_0 = arith.constant 0 : i32
    %c0_i32_1 = arith.constant 0 : i32
    return %arg0, %c0_i32, %c0_i32_0 : i32, i32, i32
  }
  func.func @transform_2(%arg0: i32) -> (i32, i32, i32) {
    %c0_i32 = arith.constant 0 : i32
    %c0_i32_0 = arith.constant 0 : i32
    %c0_i32_1 = arith.constant 0 : i32
    %c0_i32_2 = arith.constant 0 : i32
    return %c0_i32, %c0_i32_0, %c0_i32_1 : i32, i32, i32
  }
  func.func @transform_3(%arg0: i32) -> (i32, i32) {
    %c0_i32 = arith.constant 0 : i32
    %c0_i32_0 = arith.constant 0 : i32
    %c0_i32_1 = arith.constant 0 : i32
    return %c0_i32, %c0_i32_0 : i32, i32
  }
  func.func @transform_4(%arg0: i32) -> (i32, i32, i32) {
    %c0_i32 = arith.constant 0 : i32
    %c0_i32_0 = arith.constant 0 : i32
    %c0_i32_1 = arith.constant 0 : i32
    return %arg0, %c0_i32, %c0_i32_0 : i32, i32, i32
  }
}

</mosaic_0001>

<llo_original>
// kernel: tpu_custom_call.1
$region0: #{tpu_custom_call.1}
  #allocation0 [shape = 'u32[]', space=smem, size = 0x4, offset = 0x4, fixed_abs, tag = 'smem constant byte address 0x4 - core index']
  #allocation1 [shape = 'u32[144,128]{1,0:T(1,128)}', space=vmem, size = 0x12000, scoped, tag = 'internal scratch']
  #allocation2 [shape = 'f32[4,512]{1,0:T(4,128)}', space=vmem, size = 0x2000, scoped, tag = 'scratch operand']
  %s0 = inlined_call_operand.vmem [shape: f32[2,4,256], index: 0, kind: input, shape index: {}]
  %s1 = inlined_call_operand.vmem [shape: f32[2,1,256], index: 1, kind: input, shape index: {}]
  %s2 = inlined_call_operand.vmem [shape: bf16[9,8,4], index: 2, kind: input, shape index: {}]
  %s3 = inlined_call_operand.vmem [shape: f32[3,256], index: 3, kind: input, shape index: {}]
  %s4 = inlined_call_operand.hbm [shape: f32[2,8,256], index: 4, kind: output, shape index: {}]
  %s5 = sld [smem:[#allocation0]]
  $region49: #{tpu_custom_call.1} parent=0
    _
  %s7 = ssub.s32 1, %s5
  %s8 = scalar_select 0, %s7, %s5
  $region1: #{tpu_custom_call.1} parent=0
    #allocation3 [shape = 'u8[16384]{0}', space=vmem, size = 0x4000, scoped, tag = 'output window, operand 0']
    #allocation4 [shape = 's32[2]{0}', space=sflag, size = 0x8, scoped, tag = 'scoped memory for tpu_custom_call.1']
    %9 = vsyncpa [#allocation4], 0
    %s10 = scalar_lea.sflag [#allocation4], 1
    %11 = vsyncpa %s10, 0
    loop: start=0, step=1, limit=4
    $region2: #{tpu_custom_call.1} parent=1 // loop_pre_header
      _
    $region3: #{tpu_custom_call.1} parent=1 // loop_header
      %s13 = sphi 0, %s17
      %p14 = scmp.ge.s32.totalorder %s13, 4
      %s23 = sphi 0, %s25
      %s26 = sphi 0, %s23
      %s27 = sphi 0, %s26
      %s43 = sphi 0, %s27
      %s49 = sphi 0, %s51
      %s52 = sphi 0, %s49
      %s53 = sphi 0, %s52
      %s69 = sphi 0, %s53
      %s73 = sphi 0, %s73
      %s75 = sphi 0, %s73
      %s76 = sphi 0, %s75
      %s90 = sphi 0, %s76
      %s94 = sphi 0, %s94
      %s96 = sphi 0, %s94
      %s97 = sphi 0, %s96
      %s111 = sphi 0, %s97
      %s117 = sphi 0, %s119
      %s120 = sphi 0, %s117
      %s121 = sphi 0, %s120
      %s137 = sphi 0, %s121
    $region4: #{tpu_custom_call.1} parent=1 // loop_header_branch
      %16 = sbr.rel (%p14) target = $region8
    $region5: #{tpu_custom_call.1} parent=1 // loop_body
      %s18 = ssub.s32 %s13, 1
      %s19 = ssub.s32 %s13, 2
      %s20 = sadd.s32 %s13, 1
      %s21 = ssub.s32 %s13, %s20
      %p22 = scmp.eq.s32.totalorder %s21, 0
      %s24 = sadd.s32 %s23, 1
      %s25 = scalar_select %p22, %s23, %s24
      %p28 = pneg %p22
      %p29 = scmp.eq.s32.totalorder %s13, 1
      %p30 = por %p28, %p29
      %p31 = scmp.ne.s32.totalorder %s23, %s26
      %p32 = scmp.eq.s32.totalorder %s13, 0
      %p33 = por %p31, %p32
      %p34 = scmp.ne.s32.totalorder %s23, %s26
      %p35 = scmp.eq.s32.totalorder %s18, 1
      %p36 = por %p34, %p35
      %p37 = scmp.ne.s32.totalorder %s26, %s27
      %p38 = scmp.eq.s32.totalorder %s18, 0
      %p39 = por %p37, %p38
      %p40 = scmp.ne.s32.totalorder %s26, %s27
      %p41 = scmp.eq.s32.totalorder %s19, 1
      %p42 = por %p40, %p41
      %p44 = scmp.ne.s32.totalorder %s27, %s43
      %p45 = scmp.eq.s32.totalorder %s19, 0
      %p46 = por %p44, %p45
      %s47 = ssub.s32 %s13, %s20
      %p48 = scmp.eq.s32.totalorder %s47, 0
      %s50 = sadd.s32 %s49, 1
      %s51 = scalar_select %p48, %s49, %s50
      %p54 = pneg %p48
      %p55 = scmp.eq.s32.totalorder %s13, 1
      %p56 = por %p54, %p55
      %p57 = scmp.ne.s32.totalorder %s49, %s52
      %p58 = scmp.eq.s32.totalorder %s13, 0
      %p59 = por %p57, %p58
      %p60 = scmp.ne.s32.totalorder %s49, %s52
      %p61 = scmp.eq.s32.totalorder %s18, 1
      %p62 = por %p60, %p61
      %p63 = scmp.ne.s32.totalorder %s52, %s53
      %p64 = scmp.eq.s32.totalorder %s18, 0
      %p65 = por %p63, %p64
      %p66 = scmp.ne.s32.totalorder %s52, %s53
      %p67 = scmp.eq.s32.totalorder %s19, 1
      %p68 = por %p66, %p67
      %p70 = scmp.ne.s32.totalorder %s53, %s69
      %p71 = scmp.eq.s32.totalorder %s19, 0
      %p72 = por %p70, %p71
      %s74 = sadd.s32 %s73, 1
      %p77 = scmp.eq.s32.totalorder %s13, 1
      %p78 = scmp.ne.s32.totalorder %s73, %s75
      %p79 = scmp.eq.s32.totalorder %s13, 0
      %p80 = por %p78, %p79
      %p81 = scmp.ne.s32.totalorder %s73, %s75
      %p82 = scmp.eq.s32.totalorder %s18, 1
      %p83 = por %p81, %p82
      %p84 = scmp.ne.s32.totalorder %s75, %s76
      %p85 = scmp.eq.s32.totalorder %s18, 0
      %p86 = por %p84, %p85
      %p87 = scmp.ne.s32.totalorder %s75, %s76
      %p88 = scmp.eq.s32.totalorder %s19, 1
      %p89 = por %p87, %p88
      %p91 = scmp.ne.s32.totalorder %s76, %s90
      %p92 = scmp.eq.s32.totalorder %s19, 0
      %p93 = por %p91, %p92
      %s95 = sadd.s32 %s94, 1
      %p98 = scmp.eq.s32.totalorder %s13, 1
      %p99 = scmp.ne.s32.totalorder %s94, %s96
      %p100 = scmp.eq.s32.totalorder %s13, 0
      %p101 = por %p99, %p100
      %p102 = scmp.ne.s32.totalorder %s94, %s96
      %p103 = scmp.eq.s32.totalorder %s18, 1
      %p104 = por %p102, %p103
      %p105 = scmp.ne.s32.totalorder %s96, %s97
      %p106 = scmp.eq.s32.totalorder %s18, 0
      %p107 = por %p105, %p106
      %p108 = scmp.ne.s32.totalorder %s96, %s97
      %p109 = scmp.eq.s32.totalorder %s19, 1
      %p110 = por %p108, %p109
      %p112 = scmp.ne.s32.totalorder %s97, %s111
      %p113 = scmp.eq.s32.totalorder %s19, 0
      %p114 = por %p112, %p113
      %s115 = ssub.s32 %s13, %s20
      %p116 = scmp.eq.s32.totalorder %s115, 0
      %s118 = sadd.s32 %s117, 1
      %s119 = scalar_select %p116, %s117, %s118
      %p122 = pneg %p116
      %p123 = scmp.eq.s32.totalorder %s13, 1
      %p124 = por %p122, %p123
      %p125 = scmp.ne.s32.totalorder %s117, %s120
      %p126 = scmp.eq.s32.totalorder %s13, 0
      %p127 = por %p125, %p126
      %p128 = scmp.ne.s32.totalorder %s117, %s120
      %p129 = scmp.eq.s32.totalorder %s18, 1
      %p130 = por %p128, %p129
      %p131 = scmp.ne.s32.totalorder %s120, %s121
      %p132 = scmp.eq.s32.totalorder %s18, 0
      %p133 = por %p131, %p132
      %p134 = scmp.ne.s32.totalorder %s120, %s121
      %p135 = scmp.eq.s32.totalorder %s19, 1
      %p136 = por %p134, %p135
      %p138 = scmp.ne.s32.totalorder %s121, %s137
      %p139 = scmp.eq.s32.totalorder %s19, 0
      %p140 = por %p138, %p139
      %p141 = scmp.le.s32.totalorder 1, %s13
      %p142 = scmp.lt.s32.totalorder %s13, 3
      %p143 = pnand %p141, %p142
      %p144 = pneg %p143
      // Predicated region
      $region9: #{tpu_custom_call.1} parent=5 // pred_check
        _
      $region10: #{tpu_custom_call.1} parent=5 // pred_check_branch
        %146 = sbr.rel (%p143) target = $region12
      $region11: #{tpu_custom_call.1} parent=5 // pred_region
        %s147 = ssub.s32 %s13, 1
        // Predicated region
        $region13: #{tpu_custom_call.1} parent=11 // pred_check
          %p148 = pneg %p86
        $region14: #{tpu_custom_call.1} parent=11 // pred_check_branch
          %150 = sbr.rel (%p148) target = $region16
        $region15: #{tpu_custom_call.1} parent=11 // pred_region
          _
        $region16: #{tpu_custom_call.1} parent=11 // pred_fallthru
          _
        // Predicated region
        $region17: #{tpu_custom_call.1} parent=11 // pred_check
          %p151 = pneg %p107
        $region18: #{tpu_custom_call.1} parent=11 // pred_check_branch
          %153 = sbr.rel (%p151) target = $region20
        $region19: #{tpu_custom_call.1} parent=11 // pred_region
          _
        $region20: #{tpu_custom_call.1} parent=11 // pred_fallthru
          _
      $region12: #{tpu_custom_call.1} parent=5 // pred_fallthru
        _
      %p154 = scmp.lt.s32.totalorder %s13, 2
      // Predicated region
      $region21: #{tpu_custom_call.1} parent=5 // pred_check
        %p155 = pneg %p154
      $region22: #{tpu_custom_call.1} parent=5 // pred_check_branch
        %157 = sbr.rel (%p155) target = $region24
      $region23: #{tpu_custom_call.1} parent=5 // pred_region
        // Predicated region
        $region25: #{tpu_custom_call.1} parent=23 // pred_check
          %p158 = pneg %p33
        $region26: #{tpu_custom_call.1} parent=23 // pred_check_branch
          %160 = sbr.rel (%p158) target = $region28
        $region27: #{tpu_custom_call.1} parent=23 // pred_region
          %p161 = scmp.lt.s32.totalorder %s13, 1
          %s162 = scalar_select %p161, %s13, 1
          %s163 = smul.addr %s162, 2
          %s164 = smul.addr %s163, 4
          %s165 = scalar_lea.vmem %s0, %s164
        $region28: #{tpu_custom_call.1} parent=23 // pred_fallthru
          _
        // Predicated region
        $region29: #{tpu_custom_call.1} parent=23 // pred_check
          %p166 = pneg %p59
        $region30: #{tpu_custom_call.1} parent=23 // pred_check_branch
          %168 = sbr.rel (%p166) target = $region32
        $region31: #{tpu_custom_call.1} parent=23 // pred_region
          %p169 = scmp.lt.s32.totalorder %s13, 1
          %s170 = scalar_select %p169, %s13, 1
          %s171 = smul.addr %s170, 2
          %s172 = scalar_lea.vmem %s1, %s171
        $region32: #{tpu_custom_call.1} parent=23 // pred_fallthru
          _
      $region24: #{tpu_custom_call.1} parent=5 // pred_fallthru
        _
      %p173 = scmp.le.s32.totalorder 1, %s13
      %p174 = scmp.lt.s32.totalorder %s13, 3
      %p175 = pnand %p173, %p174
      %p176 = pneg %p175
      // Predicated region
      $region33: #{tpu_custom_call.1} parent=5 // pred_check
        _
      $region34: #{tpu_custom_call.1} parent=5 // pred_check_branch
        %178 = sbr.rel (%p175) target = $region36
      $region35: #{tpu_custom_call.1} parent=5 // pred_region
        %s179 = ssub.s32 %s13, 1
        %p180 = scmp.lt.s32.totalorder %s18, 1
        %s181 = scalar_select %p180, %s18, 1
        %s182 = smul.addr %s181, 2
        %s183 = smul.addr %s182, 4
        %s184 = scalar_lea.vmem %s0, %s183
        %p185 = pneg %p39
        %p186 = pneg %p36
        %p187 = scmp.lt.s32.totalorder %s18, 1
        %s188 = scalar_select %p187, %s18, 1
        %s189 = smul.addr %s188, 2
        %s190 = scalar_lea.vmem %s1, %s189
        %p191 = pneg %p65
        %p192 = pneg %p62
        %p193 = pneg %p86
        %p194 = pneg %p83
        %p195 = pneg %p107
        %p196 = pneg %p104
        %p197 = pneg %p133
        %p198 = pneg %p130
        %s199 = sand.u32 %s120, 1
        %s200 = scalar_lea.sflag [#allocation4], %s199
        %s201 = sand.u32 %s120, 1
        %s202 = smul.addr %s201, 16
        %s203 = scalar_lea.vmem [#allocation3], %s202
        %p204 = scmp.lt.s32.totalorder %s18, 1
        %s205 = scalar_select %p204, %s18, 1
        %s206 = smul.addr %s205, 2
        %s207 = smul.addr %s206, 4
        %s208 = scalar_lea.vmem %s0, %s207
        %p209 = scmp.lt.s32.totalorder %s18, 1
        %s210 = scalar_select %p209, %s18, 1
        %s211 = smul.addr %s210, 2
        %s212 = scalar_lea.vmem %s1, %s211
        %214 = vst [vmem:[#allocation2] sm:$0xf] 0.0
        %215 = vst [vmem:[#allocation2 + $0xc] sm:$0xf] 0.0
        %v216 = vld [vmem:[%s212] sm:$0x3]
        %vm217 = vcmp.ne.f32.partialorder %v216, 0.0
        %v218 = vld [vmem:[%s208] sm:$0xff]
        %v219 = vsel %vm217, 1, 0
        %v220 = vlaneseq
        %v221 = vshrl.u32 %v220, 7
        %v222 = vsub.s32 0, %v221
        %v223 = vrot.slane %v219, %v222
        %v224 = vlaneseq
        %v225 = vshrl.u32 %v224, 7
        %v226 = vsub.s32 1, %v225
        %v227 = vrot.slane %v219, %v226
        %vm228 = vcmp.eq.s32.totalorder %v223, 1
        %vm229 = vcmp.eq.s32.totalorder %v227, 1
        %v231 = vcombine.high %v218, %v218
        %v233 = vsel %vm228, 0.0, %v218
        %v234 = vsel %vm229, 0.0, %v231
        %v237 = vcombine.low %v233, %v234
        %239 = vst [vmem:[#allocation2 + $0x4] sm:$0xff] %v237
        %v240 = vld [vmem:[#allocation2] sm:$0xff]
        %v241 = vld [vmem:[#allocation2 + $0x8] sm:$0xf]
        %v242 = vld [vmem:[%s3] ss:$4 sm:$0x3]
        %v244 = vlaneseq
        %v245 = vshrl.u32 %v244, 7
        %v246 = vsub.s32 0, %v245
        %v247 = vrot.slane %v242, %v246
        %v248 = vlaneseq
        %v249 = vshrl.u32 %v248, 7
        %v250 = vsub.s32 1, %v249
        %v251 = vrot.slane %v242, %v250
        %v252 = vcombine.low %v247, %v251
        %253 = vrot.lane.b32.xlu0 %v252, 111
        %v254 = vpop.permute.xlu0 %253
        %v255 = vrot.slane %v254, 4
        %vm256 = vcmask 908288
        %v257 = vsel %vm256, %v255, %v254
        %v260 = vmul.f32 %v240, %v257
        %v261 = vmul.f32 %v241, %v255
        %v262 = vld [vmem:[%s2] sm:$0xf]
        %v264 = vcombine.high %v260, %v260
        %v266 = vpack.c.bf16 %v260, %v260
        %v267 = vpack.c.bf16 %v264, %v264
        %v268 = vpack.c.bf16 %v261, %v261
        %s269 = scalar_lea.vmem %s2, 4
        %v270 = vld [vmem:[%s269] sm:$0xf]
        %v272 = vcombine.high %v240, %v240
        %v274 = vpack.c.bf16 %v240, %v240
        %v275 = vpack.c.bf16 %v272, %v272
        %v276 = vpack.c.bf16 %v241, %v241
        %280 = vrot.lane.b32.xlu0 %v274, 16
        %v281 = vpop.permute.xlu0 %280
        %282 = vrot.lane.b32.xlu0 %v275, 16
        %v283 = vpop.permute.xlu0 %282
        %284 = vrot.lane.b32.xlu0 %v276, 16
        %v285 = vpop.permute.xlu0 %284
        %vm286 = vcmask 130048
        %v287 = vsel %vm286, %v281, %v283
        %v288 = vsel %vm286, %v283, %v285
        %vm289 = vcmask 31744
        %v291 = vsel %vm289, %v270, 0
        %vm293 = vcmask 1041408
        %v295 = vsel %vm293, %v287, 0
        %v298 = vsel %vm293, %v288, 0
        %300 = vmatprep.subr.bf16.mxu0 0
        %301 = vmatpush1.bf16.msra.mxu0 0
        %302 = vmatprep.subr.bf16.mxu0 0
        %303 = vmatpush1.bf16.msra.mxu0 0
        %304 = vmatprep.subr.bf16.mxu0 0
        %305 = vmatpush1.bf16.msra.mxu0 0
        %306 = vmatprep.subr.bf16.mxu0 0
        %307 = vmatpush1.bf16.msra.mxu0 0
        %308 = vmatprep.subr.bf16.mxu0 0
        %309 = vmatpush1.bf16.msra.mxu0 0
        %310 = vmatprep.subr.bf16.mxu0 0
        %311 = vmatpush1.bf16.msra.mxu0 0
        %312 = vmatprep.subr.bf16.mxu0 0
        %313 = vmatpush1.bf16.msra.mxu0 0
        %314 = vmatprep.subr.bf16.mxu0 %v298
        %315 = vmatpush1.bf16.msra.mxu0 %v295
        %316 = vmatprep.subr.bf16.mxu0 0
        %317 = vmatpush2.bf16.msra.mxu0 0
        %318 = vmatprep.subr.bf16.mxu0 0
        %319 = vmatpush2.bf16.msra.mxu0 0
        %320 = vmatprep.subr.bf16.mxu0 0
        %321 = vmatpush2.bf16.msra.mxu0 0
        %322 = vmatprep.subr.bf16.mxu0 0
        %323 = vmatpush2.bf16.msra.mxu0 0
        %324 = vmatprep.subr.bf16.mxu0 0
        %325 = vmatpush2.bf16.msra.mxu0 0
        %326 = vmatprep.subr.bf16.mxu0 0
        %327 = vmatpush2.bf16.msra.mxu0 0
        %328 = vmatprep.subr.bf16.mxu0 0
        %329 = vmatpush2.bf16.msra.mxu0 0
        %330 = vmatprep.subr.bf16.mxu0 0
        %331 = vmatpush2.bf16.msra.mxu0 0
        %332 = vmatprep.mubr.bf16.mxu0 0
        %333 = vmatmul.mubr.bf16.gmra.mxu0 %v291
        %v334 = vpop.f32.mrf.mxu0
        %v335 = vadd.f32 0.0, %v334
        %v336 = vpop.f32.mrf.mxu0
        %v337 = vadd.f32 0.0, %v336
        %v338 = vpop.f32.mrf.mxu0
        %v339 = vpop.f32.mrf.mxu0
        %340 = vdwg.mxu0
        %344 = vrot.lane.b32.xlu0 %v266, 17
        %v345 = vpop.permute.xlu0 %344
        %346 = vrot.lane.b32.xlu0 %v267, 17
        %v347 = vpop.permute.xlu0 %346
        %348 = vrot.lane.b32.xlu0 %v268, 17
        %v349 = vpop.permute.xlu0 %348
        %vm350 = vcmask 138240
        %v351 = vsel %vm350, %v345, %v347
        %v352 = vsel %vm350, %v347, %v349
        %v354 = vsel %vm289, %v262, 0
        %v357 = vsel %vm293, %v351, 0
        %v360 = vsel %vm293, %v352, 0
        %362 = vmatprep.subr.bf16.mxu0 0
        %363 = vmatpush1.bf16.msra.mxu0 0
        %364 = vmatprep.subr.bf16.mxu0 0
        %365 = vmatpush1.bf16.msra.mxu0 0
        %366 = vmatprep.subr.bf16.mxu0 0
        %367 = vmatpush1.bf16.msra.mxu0 0
        %368 = vmatprep.subr.bf16.mxu0 0
        %369 = vmatpush1.bf16.msra.mxu0 0
        %370 = vmatprep.subr.bf16.mxu0 0
        %371 = vmatpush1.bf16.msra.mxu0 0
        %372 = vmatprep.subr.bf16.mxu0 0
        %373 = vmatpush1.bf16.msra.mxu0 0
        %374 = vmatprep.subr.bf16.mxu0 0
        %375 = vmatpush1.bf16.msra.mxu0 0
        %376 = vmatprep.subr.bf16.mxu0 %v360
        %377 = vmatpush1.bf16.msra.mxu0 %v357
        %378 = vmatprep.subr.bf16.mxu0 0
        %379 = vmatpush2.bf16.msra.mxu0 0
        %380 = vmatprep.subr.bf16.mxu0 0
        %381 = vmatpush2.bf16.msra.mxu0 0
        %382 = vmatprep.subr.bf16.mxu0 0
        %383 = vmatpush2.bf16.msra.mxu0 0
        %384 = vmatprep.subr.bf16.mxu0 0
        %385 = vmatpush2.bf16.msra.mxu0 0
        %386 = vmatprep.subr.bf16.mxu0 0
        %387 = vmatpush2.bf16.msra.mxu0 0
        %388 = vmatprep.subr.bf16.mxu0 0
        %389 = vmatpush2.bf16.msra.mxu0 0
        %390 = vmatprep.subr.bf16.mxu0 0
        %391 = vmatpush2.bf16.msra.mxu0 0
        %392 = vmatprep.subr.bf16.mxu0 0
        %393 = vmatpush2.bf16.msra.mxu0 0
        %394 = vmatprep.mubr.bf16.mxu0 0
        %395 = vmatmul.mubr.bf16.gmra.mxu0 %v354
        %v396 = vpop.f32.mrf.mxu0
        %v397 = vadd.f32 %v335, %v396
        %v398 = vpop.f32.mrf.mxu0
        %v399 = vadd.f32 %v337, %v398
        %v400 = vpop.f32.mrf.mxu0
        %v401 = vpop.f32.mrf.mxu0
        %402 = vdwg.mxu0
        %v403 = vld [vmem:[#allocation2] sm:$0xff]
        %v404 = vld [vmem:[#allocation2 + $0x8] sm:$0xf]
        %s405 = scalar_lea.vmem %s3, 2
        %v406 = vld [vmem:[%s405] ss:$4 sm:$0x3]
        %v408 = vlaneseq
        %v409 = vshrl.u32 %v408, 7
        %v410 = vsub.s32 0, %v409
        %v411 = vrot.slane %v406, %v410
        %v412 = vlaneseq
        %v413 = vshrl.u32 %v412, 7
        %v414 = vsub.s32 1, %v413
        %v415 = vrot.slane %v406, %v414
        %v416 = vcombine.low %v411, %v415
        %417 = vrot.lane.b32.xlu0 %v416, 113
        %v418 = vpop.permute.xlu0 %417
        %v419 = vrot.slane %v418, 4
        %vm420 = vcmask 924672
        %v421 = vsel %vm420, %v419, %v418
        %v424 = vmul.f32 %v403, %v421
        %v425 = vmul.f32 %v404, %v419
        %s426 = scalar_lea.vmem %s2, 8
        %v427 = vld [vmem:[%s426] sm:$0xf]
        %v429 = vcombine.high %v424, %v424
        %v431 = vpack.c.bf16 %v424, %v424
        %v432 = vpack.c.bf16 %v429, %v429
        %v433 = vpack.c.bf16 %v425, %v425
        %437 = vrot.lane.b32.xlu0 %v431, 15
        %v438 = vpop.permute.xlu0 %437
        %439 = vrot.lane.b32.xlu0 %v432, 15
        %v440 = vpop.permute.xlu0 %439
        %441 = vrot.lane.b32.xlu0 %v433, 15
        %v442 = vpop.permute.xlu0 %441
        %vm443 = vcmask 121856
        %v444 = vsel %vm443, %v438, %v440
        %v445 = vsel %vm443, %v440, %v442
        %v447 = vsel %vm289, %v427, 0
        %v450 = vsel %vm293, %v444, 0
        %v453 = vsel %vm293, %v445, 0
        %455 = vmatprep.subr.bf16.mxu0 0
        %456 = vmatpush1.bf16.msra.mxu0 0
        %457 = vmatprep.subr.bf16.mxu0 0
        %458 = vmatpush1.bf16.msra.mxu0 0
        %459 = vmatprep.subr.bf16.mxu0 0
        %460 = vmatpush1.bf16.msra.mxu0 0
        %461 = vmatprep.subr.bf16.mxu0 0
        %462 = vmatpush1.bf16.msra.mxu0 0
        %463 = vmatprep.subr.bf16.mxu0 0
        %464 = vmatpush1.bf16.msra.mxu0 0
        %465 = vmatprep.subr.bf16.mxu0 0
        %466 = vmatpush1.bf16.msra.mxu0 0
        %467 = vmatprep.subr.bf16.mxu0 0
        %468 = vmatpush1.bf16.msra.mxu0 0
        %469 = vmatprep.subr.bf16.mxu0 %v453
        %470 = vmatpush1.bf16.msra.mxu0 %v450
        %471 = vmatprep.subr.bf16.mxu0 0
        %472 = vmatpush2.bf16.msra.mxu0 0
        %473 = vmatprep.subr.bf16.mxu0 0
        %474 = vmatpush2.bf16.msra.mxu0 0
        %475 = vmatprep.subr.bf16.mxu0 0
        %476 = vmatpush2.bf16.msra.mxu0 0
        %477 = vmatprep.subr.bf16.mxu0 0
        %478 = vmatpush2.bf16.msra.mxu0 0
        %479 = vmatprep.subr.bf16.mxu0 0
        %480 = vmatpush2.bf16.msra.mxu0 0
        %481 = vmatprep.subr.bf16.mxu0 0
        %482 = vmatpush2.bf16.msra.mxu0 0
        %483 = vmatprep.subr.bf16.mxu0 0
        %484 = vmatpush2.bf16.msra.mxu0 0
        %485 = vmatprep.subr.bf16.mxu0 0
        %486 = vmatpush2.bf16.msra.mxu0 0
        %487 = vmatprep.mubr.bf16.mxu0 0
        %488 = vmatmul.mubr.bf16.gmra.mxu0 %v447
        %v489 = vpop.f32.mrf.mxu0
        %v490 = vadd.f32 0.0, %v489
        %v491 = vpop.f32.mrf.mxu0
        %v492 = vadd.f32 0.0, %v491
        %v493 = vpop.f32.mrf.mxu0
        %v494 = vpop.f32.mrf.mxu0
        %495 = vdwg.mxu0
        %v496 = vadd.f32 %v397, %v490
        %v497 = vadd.f32 %v399, %v492
        %v498 = vld [vmem:[#allocation2] sm:$0xff]
        %v499 = vld [vmem:[#allocation2 + $0x8] sm:$0xf]
        %500 = vrot.lane.b32.xlu0 %v252, 127
        %v501 = vpop.permute.xlu0 %500
        %v502 = vrot.slane %v501, 4
        %vm503 = vcmask 1039360
        %v504 = vsel %vm503, %v502, %v501
        %v507 = vmul.f32 %v498, %v504
        %v508 = vmul.f32 %v499, %v502
        %s509 = scalar_lea.vmem %s2, 12
        %v510 = vld [vmem:[%s509] sm:$0xf]
        %v512 = vcombine.high %v507, %v507
        %v514 = vpack.c.bf16 %v507, %v507
        %v515 = vpack.c.bf16 %v512, %v512
        %v516 = vpack.c.bf16 %v508, %v508
        %520 = vrot.lane.b32.xlu0 %v514, 1
        %v521 = vpop.permute.xlu0 %520
        %522 = vrot.lane.b32.xlu0 %v515, 1
        %v523 = vpop.permute.xlu0 %522
        %524 = vrot.lane.b32.xlu0 %v516, 1
        %v525 = vpop.permute.xlu0 %524
        %vm526 = vcmask 7168
        %v527 = vsel %vm526, %v521, %v523
        %v528 = vsel %vm526, %v523, %v525
        %v530 = vsel %vm289, %v510, 0
        %v533 = vsel %vm293, %v527, 0
        %v536 = vsel %vm293, %v528, 0
        %538 = vmatprep.subr.bf16.mxu0 0
        %539 = vmatpush1.bf16.msra.mxu0 0
        %540 = vmatprep.subr.bf16.mxu0 0
        %541 = vmatpush1.bf16.msra.mxu0 0
        %542 = vmatprep.subr.bf16.mxu0 0
        %543 = vmatpush1.bf16.msra.mxu0 0
        %544 = vmatprep.subr.bf16.mxu0 0
        %545 = vmatpush1.bf16.msra.mxu0 0
        %546 = vmatprep.subr.bf16.mxu0 0
        %547 = vmatpush1.bf16.msra.mxu0 0
        %548 = vmatprep.subr.bf16.mxu0 0
        %549 = vmatpush1.bf16.msra.mxu0 0
        %550 = vmatprep.subr.bf16.mxu0 0
        %551 = vmatpush1.bf16.msra.mxu0 0
        %552 = vmatprep.subr.bf16.mxu0 %v536
        %553 = vmatpush1.bf16.msra.mxu0 %v533
        %554 = vmatprep.subr.bf16.mxu0 0
        %555 = vmatpush2.bf16.msra.mxu0 0
        %556 = vmatprep.subr.bf16.mxu0 0
        %557 = vmatpush2.bf16.msra.mxu0 0
        %558 = vmatprep.subr.bf16.mxu0 0
        %559 = vmatpush2.bf16.msra.mxu0 0
        %560 = vmatprep.subr.bf16.mxu0 0
        %561 = vmatpush2.bf16.msra.mxu0 0
        %562 = vmatprep.subr.bf16.mxu0 0
        %563 = vmatpush2.bf16.msra.mxu0 0
        %564 = vmatprep.subr.bf16.mxu0 0
        %565 = vmatpush2.bf16.msra.mxu0 0
        %566 = vmatprep.subr.bf16.mxu0 0
        %567 = vmatpush2.bf16.msra.mxu0 0
        %568 = vmatprep.subr.bf16.mxu0 0
        %569 = vmatpush2.bf16.msra.mxu0 0
        %570 = vmatprep.mubr.bf16.mxu0 0
        %571 = vmatmul.mubr.bf16.gmra.mxu0 %v530
        %v572 = vpop.f32.mrf.mxu0
        %v573 = vadd.f32 0.0, %v572
        %v574 = vpop.f32.mrf.mxu0
        %v575 = vadd.f32 0.0, %v574
        %v576 = vpop.f32.mrf.mxu0
        %v577 = vpop.f32.mrf.mxu0
        %578 = vdwg.mxu0
        %v579 = vadd.f32 %v496, %v573
        %v580 = vadd.f32 %v497, %v575
        %v581 = vld [vmem:[#allocation2 + $0x4] sm:$0xff]
        %s582 = scalar_lea.vmem %s2, 16
        %v583 = vld [vmem:[%s582] sm:$0xf]
        %v585 = vcombine.high %v581, %v581
        %v587 = vpack.c.bf16 %v581, %v581
        %v588 = vpack.c.bf16 %v585, %v585
        %v590 = vsel %vm289, %v583, 0
        %v593 = vsel %vm293, %v587, 0
        %v596 = vsel %vm293, %v588, 0
        %598 = vmatprep.subr.bf16.mxu0 0
        %599 = vmatpush1.bf16.msra.mxu0 0
        %600 = vmatprep.subr.bf16.mxu0 0
        %601 = vmatpush1.bf16.msra.mxu0 0
        %602 = vmatprep.subr.bf16.mxu0 0
        %603 = vmatpush1.bf16.msra.mxu0 0
        %604 = vmatprep.subr.bf16.mxu0 0
        %605 = vmatpush1.bf16.msra.mxu0 0
        %606 = vmatprep.subr.bf16.mxu0 0
        %607 = vmatpush1.bf16.msra.mxu0 0
        %608 = vmatprep.subr.bf16.mxu0 0
        %609 = vmatpush1.bf16.msra.mxu0 0
        %610 = vmatprep.subr.bf16.mxu0 0
        %611 = vmatpush1.bf16.msra.mxu0 0
        %612 = vmatprep.subr.bf16.mxu0 %v596
        %613 = vmatpush1.bf16.msra.mxu0 %v593
        %614 = vmatprep.subr.bf16.mxu0 0
        %615 = vmatpush2.bf16.msra.mxu0 0
        %616 = vmatprep.subr.bf16.mxu0 0
        %617 = vmatpush2.bf16.msra.mxu0 0
        %618 = vmatprep.subr.bf16.mxu0 0
        %619 = vmatpush2.bf16.msra.mxu0 0
        %620 = vmatprep.subr.bf16.mxu0 0
        %621 = vmatpush2.bf16.msra.mxu0 0
        %622 = vmatprep.subr.bf16.mxu0 0
        %623 = vmatpush2.bf16.msra.mxu0 0
        %624 = vmatprep.subr.bf16.mxu0 0
        %625 = vmatpush2.bf16.msra.mxu0 0
        %626 = vmatprep.subr.bf16.mxu0 0
        %627 = vmatpush2.bf16.msra.mxu0 0
        %628 = vmatprep.subr.bf16.mxu0 0
        %629 = vmatpush2.bf16.msra.mxu0 0
        %630 = vmatprep.mubr.bf16.mxu0 0
        %631 = vmatmul.mubr.bf16.gmra.mxu0 %v590
        %v632 = vpop.f32.mrf.mxu0
        %v633 = vadd.f32 0.0, %v632
        %v634 = vpop.f32.mrf.mxu0
        %v635 = vadd.f32 0.0, %v634
        %v636 = vpop.f32.mrf.mxu0
        %v637 = vpop.f32.mrf.mxu0
        %638 = vdwg.mxu0
        %v639 = vadd.f32 %v579, %v633
        %v640 = vadd.f32 %v580, %v635
        %v641 = vld [vmem:[#allocation2 + $0x4] sm:$0xff]
        %v642 = vld [vmem:[#allocation2 + $0xc] sm:$0xf]
        %643 = vrot.lane.b32.xlu0 %v416, 1
        %v644 = vpop.permute.xlu0 %643
        %v645 = vrot.slane %v644, 4
        %vm646 = vcmask 7168
        %v647 = vsel %vm646, %v645, %v644
        %v650 = vmul.f32 %v641, %v647
        %v651 = vmul.f32 %v642, %v645
        %s652 = scalar_lea.vmem %s2, 20
        %v653 = vld [vmem:[%s652] sm:$0xf]
        %v655 = vcombine.high %v650, %v650
        %v657 = vpack.c.bf16 %v650, %v650
        %v658 = vpack.c.bf16 %v655, %v655
        %v659 = vpack.c.bf16 %v651, %v651
        %663 = vrot.lane.b32.xlu0 %v657, 127
        %v664 = vpop.permute.xlu0 %663
        %665 = vrot.lane.b32.xlu0 %v658, 127
        %v666 = vpop.permute.xlu0 %665
        %667 = vrot.lane.b32.xlu0 %v659, 127
        %v668 = vpop.permute.xlu0 %667
        %vm669 = vcmask 1039360
        %v670 = vsel %vm669, %v664, %v666
        %v671 = vsel %vm669, %v666, %v668
        %v673 = vsel %vm289, %v653, 0
        %v676 = vsel %vm293, %v670, 0
        %v679 = vsel %vm293, %v671, 0
        %681 = vmatprep.subr.bf16.mxu0 0
        %682 = vmatpush1.bf16.msra.mxu0 0
        %683 = vmatprep.subr.bf16.mxu0 0
        %684 = vmatpush1.bf16.msra.mxu0 0
        %685 = vmatprep.subr.bf16.mxu0 0
        %686 = vmatpush1.bf16.msra.mxu0 0
        %687 = vmatprep.subr.bf16.mxu0 0
        %688 = vmatpush1.bf16.msra.mxu0 0
        %689 = vmatprep.subr.bf16.mxu0 0
        %690 = vmatpush1.bf16.msra.mxu0 0
        %691 = vmatprep.subr.bf16.mxu0 0
        %692 = vmatpush1.bf16.msra.mxu0 0
        %693 = vmatprep.subr.bf16.mxu0 0
        %694 = vmatpush1.bf16.msra.mxu0 0
        %695 = vmatprep.subr.bf16.mxu0 %v679
        %696 = vmatpush1.bf16.msra.mxu0 %v676
        %697 = vmatprep.subr.bf16.mxu0 0
        %698 = vmatpush2.bf16.msra.mxu0 0
        %699 = vmatprep.subr.bf16.mxu0 0
        %700 = vmatpush2.bf16.msra.mxu0 0
        %701 = vmatprep.subr.bf16.mxu0 0
        %702 = vmatpush2.bf16.msra.mxu0 0
        %703 = vmatprep.subr.bf16.mxu0 0
        %704 = vmatpush2.bf16.msra.mxu0 0
        %705 = vmatprep.subr.bf16.mxu0 0
        %706 = vmatpush2.bf16.msra.mxu0 0
        %707 = vmatprep.subr.bf16.mxu0 0
        %708 = vmatpush2.bf16.msra.mxu0 0
        %709 = vmatprep.subr.bf16.mxu0 0
        %710 = vmatpush2.bf16.msra.mxu0 0
        %711 = vmatprep.subr.bf16.mxu0 0
        %712 = vmatpush2.bf16.msra.mxu0 0
        %713 = vmatprep.mubr.bf16.mxu0 0
        %714 = vmatmul.mubr.bf16.gmra.mxu0 %v673
        %v715 = vpop.f32.mrf.mxu0
        %v716 = vadd.f32 0.0, %v715
        %v717 = vpop.f32.mrf.mxu0
        %v718 = vadd.f32 0.0, %v717
        %v719 = vpop.f32.mrf.mxu0
        %v720 = vpop.f32.mrf.mxu0
        %721 = vdwg.mxu0
        %v722 = vadd.f32 %v639, %v716
        %v723 = vadd.f32 %v640, %v718
        %v724 = vld [vmem:[#allocation2 + $0x4] sm:$0xff]
        %v725 = vld [vmem:[#allocation2 + $0xc] sm:$0xf]
        %726 = vrot.lane.b32.xlu0 %v252, 15
        %v727 = vpop.permute.xlu0 %726
        %v728 = vrot.slane %v727, 4
        %vm729 = vcmask 121856
        %v730 = vsel %vm729, %v728, %v727
        %v733 = vmul.f32 %v724, %v730
        %v734 = vmul.f32 %v725, %v728
        %s735 = scalar_lea.vmem %s2, 24
        %v736 = vld [vmem:[%s735] sm:$0xf]
        %v738 = vcombine.high %v733, %v733
        %v740 = vpack.c.bf16 %v733, %v733
        %v741 = vpack.c.bf16 %v738, %v738
        %v742 = vpack.c.bf16 %v734, %v734
        %746 = vrot.lane.b32.xlu0 %v740, 113
        %v747 = vpop.permute.xlu0 %746
        %748 = vrot.lane.b32.xlu0 %v741, 113
        %v749 = vpop.permute.xlu0 %748
        %750 = vrot.lane.b32.xlu0 %v742, 113
        %v751 = vpop.permute.xlu0 %750
        %vm752 = vcmask 924672
        %v753 = vsel %vm752, %v747, %v749
        %v754 = vsel %vm752, %v749, %v751
        %v756 = vsel %vm289, %v736, 0
        %v759 = vsel %vm293, %v753, 0
        %v762 = vsel %vm293, %v754, 0
        %764 = vmatprep.subr.bf16.mxu0 0
        %765 = vmatpush1.bf16.msra.mxu0 0
        %766 = vmatprep.subr.bf16.mxu0 0
        %767 = vmatpush1.bf16.msra.mxu0 0
        %768 = vmatprep.subr.bf16.mxu0 0
        %769 = vmatpush1.bf16.msra.mxu0 0
        %770 = vmatprep.subr.bf16.mxu0 0
        %771 = vmatpush1.bf16.msra.mxu0 0
        %772 = vmatprep.subr.bf16.mxu0 0
        %773 = vmatpush1.bf16.msra.mxu0 0
        %774 = vmatprep.subr.bf16.mxu0 0
        %775 = vmatpush1.bf16.msra.mxu0 0
        %776 = vmatprep.subr.bf16.mxu0 0
        %777 = vmatpush1.bf16.msra.mxu0 0
        %778 = vmatprep.subr.bf16.mxu0 %v762
        %779 = vmatpush1.bf16.msra.mxu0 %v759
        %780 = vmatprep.subr.bf16.mxu0 0
        %781 = vmatpush2.bf16.msra.mxu0 0
        %782 = vmatprep.subr.bf16.mxu0 0
        %783 = vmatpush2.bf16.msra.mxu0 0
        %784 = vmatprep.subr.bf16.mxu0 0
        %785 = vmatpush2.bf16.msra.mxu0 0
        %786 = vmatprep.subr.bf16.mxu0 0
        %787 = vmatpush2.bf16.msra.mxu0 0
        %788 = vmatprep.subr.bf16.mxu0 0
        %789 = vmatpush2.bf16.msra.mxu0 0
        %790 = vmatprep.subr.bf16.mxu0 0
        %791 = vmatpush2.bf16.msra.mxu0 0
        %792 = vmatprep.subr.bf16.mxu0 0
        %793 = vmatpush2.bf16.msra.mxu0 0
        %794 = vmatprep.subr.bf16.mxu0 0
        %795 = vmatpush2.bf16.msra.mxu0 0
        %796 = vmatprep.mubr.bf16.mxu0 0
        %797 = vmatmul.mubr.bf16.gmra.mxu0 %v756
        %v798 = vpop.f32.mrf.mxu0
        %v799 = vadd.f32 0.0, %v798
        %v800 = vpop.f32.mrf.mxu0
        %v801 = vadd.f32 0.0, %v800
        %v802 = vpop.f32.mrf.mxu0
        %v803 = vpop.f32.mrf.mxu0
        %804 = vdwg.mxu0
        %v805 = vadd.f32 %v722, %v799
        %v806 = vadd.f32 %v723, %v801
        %v807 = vld [vmem:[#allocation2 + $0x4] sm:$0xff]
        %v808 = vld [vmem:[#allocation2 + $0xc] sm:$0xf]
        %s809 = scalar_lea.vmem %s2, 28
        %v810 = vld [vmem:[%s809] sm:$0xf]
        %v812 = vcombine.high %v807, %v807
        %v814 = vpack.c.bf16 %v807, %v807
        %v815 = vpack.c.bf16 %v812, %v812
        %v816 = vpack.c.bf16 %v808, %v808
        %820 = vrot.lane.b32.xlu0 %v814, 112
        %v821 = vpop.permute.xlu0 %820
        %822 = vrot.lane.b32.xlu0 %v815, 112
        %v823 = vpop.permute.xlu0 %822
        %824 = vrot.lane.b32.xlu0 %v816, 112
        %v825 = vpop.permute.xlu0 %824
        %vm826 = vcmask 916480
        %v827 = vsel %vm826, %v821, %v823
        %v828 = vsel %vm826, %v823, %v825
        %v830 = vsel %vm289, %v810, 0
        %v833 = vsel %vm293, %v827, 0
        %v836 = vsel %vm293, %v828, 0
        %838 = vmatprep.subr.bf16.mxu0 0
        %839 = vmatpush1.bf16.msra.mxu0 0
        %840 = vmatprep.subr.bf16.mxu0 0
        %841 = vmatpush1.bf16.msra.mxu0 0
        %842 = vmatprep.subr.bf16.mxu0 0
        %843 = vmatpush1.bf16.msra.mxu0 0
        %844 = vmatprep.subr.bf16.mxu0 0
        %845 = vmatpush1.bf16.msra.mxu0 0
        %846 = vmatprep.subr.bf16.mxu0 0
        %847 = vmatpush1.bf16.msra.mxu0 0
        %848 = vmatprep.subr.bf16.mxu0 0
        %849 = vmatpush1.bf16.msra.mxu0 0
        %850 = vmatprep.subr.bf16.mxu0 0
        %851 = vmatpush1.bf16.msra.mxu0 0
        %852 = vmatprep.subr.bf16.mxu0 %v836
        %853 = vmatpush1.bf16.msra.mxu0 %v833
        %854 = vmatprep.subr.bf16.mxu0 0
        %855 = vmatpush2.bf16.msra.mxu0 0
        %856 = vmatprep.subr.bf16.mxu0 0
        %857 = vmatpush2.bf16.msra.mxu0 0
        %858 = vmatprep.subr.bf16.mxu0 0
        %859 = vmatpush2.bf16.msra.mxu0 0
        %860 = vmatprep.subr.bf16.mxu0 0
        %861 = vmatpush2.bf16.msra.mxu0 0
        %862 = vmatprep.subr.bf16.mxu0 0
        %863 = vmatpush2.bf16.msra.mxu0 0
        %864 = vmatprep.subr.bf16.mxu0 0
        %865 = vmatpush2.bf16.msra.mxu0 0
        %866 = vmatprep.subr.bf16.mxu0 0
        %867 = vmatpush2.bf16.msra.mxu0 0
        %868 = vmatprep.subr.bf16.mxu0 0
        %869 = vmatpush2.bf16.msra.mxu0 0
        %870 = vmatprep.mubr.bf16.mxu0 0
        %871 = vmatmul.mubr.bf16.gmra.mxu0 %v830
        %v872 = vpop.f32.mrf.mxu0
        %v873 = vadd.f32 0.0, %v872
        %v874 = vpop.f32.mrf.mxu0
        %v875 = vadd.f32 0.0, %v874
        %v876 = vpop.f32.mrf.mxu0
        %v877 = vpop.f32.mrf.mxu0
        %878 = vdwg.mxu0
        %v879 = vadd.f32 %v805, %v873
        %v880 = vadd.f32 %v806, %v875
        %v881 = vld [vmem:[#allocation2 + $0x4] sm:$0xff]
        %v882 = vld [vmem:[#allocation2 + $0xc] sm:$0xf]
        %883 = vrot.lane.b32.xlu0 %v416, 17
        %v884 = vpop.permute.xlu0 %883
        %v885 = vrot.slane %v884, 4
        %vm886 = vcmask 138240
        %v887 = vsel %vm886, %v885, %v884
        %v890 = vmul.f32 %v881, %v887
        %v891 = vmul.f32 %v882, %v885
        %s892 = scalar_lea.vmem %s2, 32
        %v893 = vld [vmem:[%s892] sm:$0xf]
        %v895 = vcombine.high %v890, %v890
        %v897 = vpack.c.bf16 %v890, %v890
        %v898 = vpack.c.bf16 %v895, %v895
        %v899 = vpack.c.bf16 %v891, %v891
        %903 = vrot.lane.b32.xlu0 %v897, 111
        %v904 = vpop.permute.xlu0 %903
        %905 = vrot.lane.b32.xlu0 %v898, 111
        %v906 = vpop.permute.xlu0 %905
        %907 = vrot.lane.b32.xlu0 %v899, 111
        %v908 = vpop.permute.xlu0 %907
        %vm909 = vcmask 908288
        %v910 = vsel %vm909, %v904, %v906
        %v911 = vsel %vm909, %v906, %v908
        %v913 = vsel %vm289, %v893, 0
        %v916 = vsel %vm293, %v910, 0
        %v919 = vsel %vm293, %v911, 0
        %921 = vmatprep.subr.bf16.mxu0 0
        %922 = vmatpush1.bf16.msra.mxu0 0
        %923 = vmatprep.subr.bf16.mxu0 0
        %924 = vmatpush1.bf16.msra.mxu0 0
        %925 = vmatprep.subr.bf16.mxu0 0
        %926 = vmatpush1.bf16.msra.mxu0 0
        %927 = vmatprep.subr.bf16.mxu0 0
        %928 = vmatpush1.bf16.msra.mxu0 0
        %929 = vmatprep.subr.bf16.mxu0 0
        %930 = vmatpush1.bf16.msra.mxu0 0
        %931 = vmatprep.subr.bf16.mxu0 0
        %932 = vmatpush1.bf16.msra.mxu0 0
        %933 = vmatprep.subr.bf16.mxu0 0
        %934 = vmatpush1.bf16.msra.mxu0 0
        %935 = vmatprep.subr.bf16.mxu0 %v919
        %936 = vmatpush1.bf16.msra.mxu0 %v916
        %937 = vmatprep.subr.bf16.mxu0 0
        %938 = vmatpush2.bf16.msra.mxu0 0
        %939 = vmatprep.subr.bf16.mxu0 0
        %940 = vmatpush2.bf16.msra.mxu0 0
        %941 = vmatprep.subr.bf16.mxu0 0
        %942 = vmatpush2.bf16.msra.mxu0 0
        %943 = vmatprep.subr.bf16.mxu0 0
        %944 = vmatpush2.bf16.msra.mxu0 0
        %945 = vmatprep.subr.bf16.mxu0 0
        %946 = vmatpush2.bf16.msra.mxu0 0
        %947 = vmatprep.subr.bf16.mxu0 0
        %948 = vmatpush2.bf16.msra.mxu0 0
        %949 = vmatprep.subr.bf16.mxu0 0
        %950 = vmatpush2.bf16.msra.mxu0 0
        %951 = vmatprep.subr.bf16.mxu0 0
        %952 = vmatpush2.bf16.msra.mxu0 0
        %953 = vmatprep.mubr.bf16.mxu0 0
        %954 = vmatmul.mubr.bf16.gmra.mxu0 %v913
        %v955 = vpop.f32.mrf.mxu0
        %v956 = vadd.f32 0.0, %v955
        %v957 = vpop.f32.mrf.mxu0
        %v958 = vadd.f32 0.0, %v957
        %v959 = vpop.f32.mrf.mxu0
        %v960 = vpop.f32.mrf.mxu0
        %961 = vdwg.mxu0
        %v962 = vadd.f32 %v879, %v956
        %v963 = vadd.f32 %v880, %v958
        %964 = vst [vmem:[%s203] sm:$0xff] %v962
        %965 = vst [vmem:[%s203 + $0x8] sm:$0xff] %v963
        %s966 = sand.u32 %s120, 1
        %s967 = scalar_lea.sflag [#allocation4], %s966
        %s968 = sand.u32 %s120, 1
        %s969 = smul.addr %s968, 16
        %s970 = scalar_lea.vmem [#allocation3], %s969
        // Predicated region
        $region37: #{tpu_custom_call.1} parent=35 // pred_check
          %p971 = pneg %p130
        $region38: #{tpu_custom_call.1} parent=35 // pred_check_branch
          %973 = sbr.rel (%p971) target = $region40
        $region39: #{tpu_custom_call.1} parent=35 // pred_region
          %s975 = ssub.s32 256, 256
          %976 = vsyncadd %s967, %s975
          %s977 = smul.addr %s18, 2
          %s978 = smul.addr %s977, 128
          %s979 = scalar_lea.hbm %s4, %s978
          %s981 = sshll.u32 %s970, 4
          %s982 = int_to_ptr.vmem [resolvable:$true] %s981
          %984 = dma.vmem_to_hbm [thread:$0]  %s982, 256, %s979, %s967
        $region40: #{tpu_custom_call.1} parent=35 // pred_fallthru
          _
      $region36: #{tpu_custom_call.1} parent=5 // pred_fallthru
        _
      %p985 = scmp.le.s32.totalorder 2, %s13
      // Predicated region
      $region41: #{tpu_custom_call.1} parent=5 // pred_check
        %p986 = pneg %p985
      $region42: #{tpu_custom_call.1} parent=5 // pred_check_branch
        %988 = sbr.rel (%p986) target = $region44
      $region43: #{tpu_custom_call.1} parent=5 // pred_region
        %s989 = ssub.s32 %s13, 2
        // Predicated region
        $region45: #{tpu_custom_call.1} parent=43 // pred_check
          %p990 = pneg %p136
        $region46: #{tpu_custom_call.1} parent=43 // pred_check_branch
          %992 = sbr.rel (%p990) target = $region48
        $region47: #{tpu_custom_call.1} parent=43 // pred_region
          %s993 = sand.u32 %s121, 1
          %s994 = scalar_lea.sflag [#allocation4], %s993
          %s995 = sand.u32 %s121, 1
          %s996 = smul.addr %s995, 16
          %s997 = scalar_lea.vmem [#allocation3], %s996
          %998 = dma.done %s994, 256
        $region48: #{tpu_custom_call.1} parent=43 // pred_fallthru
          _
      $region44: #{tpu_custom_call.1} parent=5 // pred_fallthru
        _
    $region6: #{tpu_custom_call.1} parent=1 // loop_footer
      %s17 = sadd.s32 1, %s13
    $region7: #{tpu_custom_call.1} parent=1 // loop_footer_branch
      %12 = sbr.rel target = $region3
    $region8: #{tpu_custom_call.1} parent=1 // loop_exit
      _
    %999 = vsyncpa [#allocation4], 1
    %s1000 = scalar_lea.sflag [#allocation4], 1
    %1001 = vsyncpa %s1000, 1

</llo_original>
